<compile_context>
chip_gen: v6e
topology: v6e:2x2x1
jax: 0.10.0
libtpu: 0.0.40
codegen_flags: <defaults>
</compile_context>

<pallas_src>
import functools

import jax
import jax.numpy as jnp
from jax import lax
from jax.experimental import pallas as pl
from jax.experimental.pallas import tpu as pltpu


def _round_up(x, m):
    return ((x + m - 1) // m) * m


def _rgb_render_kernel(rgb_ref, w_ref, out_ref, *, bg, training):
    # rgb_ref: (3, S, tile_R)   w_ref: (S, tile_R)   out_ref: (3, tile_R)
    rgb = rgb_ref[...]
    w = w_ref[...]

    # Weighted sum over samples: broadcast weights across the channel planes
    # (free), reduce over the sublane (S) axis.
    comp = jnp.sum(rgb * w[None, :, :], axis=1)            # (3, tile_R)
    residual = 1.0 - jnp.sum(w, axis=0, keepdims=True)     # (1, tile_R)

    # Per-channel background built from Python scalar constants (no captured
    # f32[3] array): channel index via iota + selects.
    ch = lax.broadcasted_iota(jnp.int32, comp.shape, 0)    # (3, tile_R)
    bg_map = jnp.where(ch == 0, bg[0], jnp.where(ch == 1, bg[1], bg[2]))

    out = comp + bg_map * residual

    if not training:
        # torch.clamp_(comp_rgb, 0.0, 1.0) in eval mode
        out = jnp.clip(out, 0.0, 1.0)

    out_ref[...] = out.astype(out_ref.dtype)


def rgb_renderer(rgb, weights, *, background_color=(0.0, 0.0, 0.0),
                 training=True, tile_rays=None):
    """Pallas implementation of RGBRenderer.forward.

    Args:
      rgb:     (num_rays, num_samples, 3) float32
      weights: (num_rays, num_samples, 1) float32
      background_color: length-3 tuple of floats
      training: if False, output is clamped to [0, 1] (matches torch eval mode)
    Returns:
      comp_rgb: (num_rays, 3)
    """
    num_rays, num_samples, c = rgb.shape
    assert c == 3
    assert weights.shape == (num_rays, num_samples, 1)

    # Lane-dense layout: rays go on the lane (last) axis.
    rgb_t = jnp.transpose(rgb, (2, 1, 0))          # (3, S, R)
    w_t = jnp.transpose(weights[..., 0], (1, 0))   # (S, R)

    # Ray tile: as large as possible (amortize per-step overhead), capped so
    # double-buffered f32 blocks stay well under the v5e 16 MiB scoped default.
    bytes_per_ray = 8 * (4 * num_samples + 3)      # (rgb + w + out) * 2 buffers
    vmem_budget = 12 * 1024 * 1024
    cap = max(128, (vmem_budget // bytes_per_ray) // 128 * 128)
    if tile_rays is None:
        tile_rays = min(2048, _round_up(num_rays, 128))
    tile_rays = max(128, (tile_rays // 128) * 128)
    tile_rays = min(tile_rays, cap)

    rays_padded = _round_up(num_rays, tile_rays)
    if rays_padded != num_rays:
        pad = rays_padded - num_rays
        rgb_t = jnp.pad(rgb_t, ((0, 0), (0, 0), (0, pad)))
        w_t = jnp.pad(w_t, ((0, 0), (0, pad)))

    grid = (rays_padded // tile_rays,)

    kernel = functools.partial(
        _rgb_render_kernel,
        bg=tuple(float(v) for v in background_color),
        training=bool(training),
    )

    out = pl.pallas_call(
        kernel,
        out_shape=jax.ShapeDtypeStruct((3, rays_padded), rgb.dtype),
        grid_spec=pl.GridSpec(
            grid=grid,
            in_specs=[
                pl.BlockSpec((3, num_samples, tile_rays), lambda i: (0, 0, i)),
                pl.BlockSpec((num_samples, tile_rays), lambda i: (0, i)),
            ],
            out_specs=pl.BlockSpec((3, tile_rays), lambda i: (0, i)),
        ),
        compiler_params=pltpu.CompilerParams(
            dimension_semantics=("parallel",)),
    )(rgb_t, w_t)

    out = out[:, :num_rays]          # drop padded rays
    return jnp.transpose(out, (1, 0))  # back to (num_rays, 3)


def _reference(rgb, weights, background_color=(0.0, 0.0, 0.0), training=True):
    comp_rgb = jnp.sum(weights * rgb, axis=-2)
    acc = jnp.sum(weights, axis=-2)
    bg = jnp.asarray(background_color, dtype=comp_rgb.dtype)
    comp_rgb = comp_rgb + bg * (1.0 - acc)
    if not training:
        comp_rgb = jnp.clip(comp_rgb, 0.0, 1.0)
    return comp_rgb


if __name__ == "__main__":
    key = jax.random.PRNGKey(0)
    k1, k2 = jax.random.split(key)

    # Non-multiple-of-128 ray count exercises the padded-tail path.
    num_rays, num_samples = 1000, 16
    rgb = jax.random.uniform(k1, (num_rays, num_samples, 3), dtype=jnp.float32)
    # weights roughly in [0, 1], not necessarily summing to 1 along samples
    weights = jax.random.uniform(
        k2, (num_rays, num_samples, 1), dtype=jnp.float32) * 0.1

    bg = (0.1, 0.2, 0.3)

    # training=True path: no clamp
    out_train = rgb_renderer(rgb, weights, background_color=bg, training=True)
    out_train = jax.block_until_ready(out_train)
    ref_train = _reference(rgb, weights, bg, training=True)

    # eval path: clamp to [0, 1]
    out_eval = rgb_renderer(rgb, weights, background_color=bg, training=False)
    out_eval = jax.block_until_ready(out_eval)
    ref_eval = _reference(rgb, weights, bg, training=False)

    assert out_train.shape == (num_rays, 3)
    assert jnp.allclose(out_train, ref_train, atol=1e-5, rtol=1e-5)
    assert jnp.allclose(out_eval, ref_eval, atol=1e-5, rtol=1e-5)

    # Multi-block case (grid > 1) with an explicit small tile.
    out_multi = rgb_renderer(rgb, weights, background_color=bg,
                             training=True, tile_rays=128)
    out_multi = jax.block_until_ready(out_multi)
    assert jnp.allclose(out_multi, ref_train, atol=1e-5, rtol=1e-5)

    print("KERNEL_OK")
</pallas_src>

<mosaic_0001>
module attributes {stable_mosaic.version = 11 : i64} {
  func.func @_rgb_render_kernel(%arg0: i32, %arg1: memref<3x16x1024xf32, #tpu.memory_space<vmem>>, %arg2: memref<16x1024xf32, #tpu.memory_space<vmem>>, %arg3: memref<3x1024xf32, #tpu.memory_space<vmem>>) attributes {dimension_semantics = [#tpu.dimension_semantics<parallel>], iteration_bounds = array<i64: 1>, scalar_prefetch = 0 : i64, scratch_operands = 0 : i64, tpu.core_type = #tpu.core_type<tc>, window_params = [{transform_indices = @transform_0, window_bounds = array<i64: 3, 16, 1024>}, {transform_indices = @transform_1, window_bounds = array<i64: 16, 1024>}, {transform_indices = @transform_2, window_bounds = array<i64: 3, 1024>}]} {
    %c0 = arith.constant 0 : index
    %c0_0 = arith.constant 0 : index
    %c0_1 = arith.constant 0 : index
    %0 = vector.load %arg1[%c0, %c0_0, %c0_1] : memref<3x16x1024xf32, #tpu.memory_space<vmem>>, vector<3x16x1024xf32>
    %c0_2 = arith.constant 0 : index
    %c0_3 = arith.constant 0 : index
    %1 = vector.load %arg2[%c0_2, %c0_3] : memref<16x1024xf32, #tpu.memory_space<vmem>>, vector<16x1024xf32>
    %2 = vector.shape_cast %1 : vector<16x1024xf32> to vector<1x16x1024xf32>
    %3 = vector.broadcast %2 : vector<1x16x1024xf32> to vector<3x16x1024xf32>
    %4 = arith.mulf %0, %3 : vector<3x16x1024xf32>
    %cst = arith.constant dense<0.000000e+00> : vector<3x1024xf32>
    %5 = vector.multi_reduction <add>, %4, %cst [1] : vector<3x16x1024xf32> to vector<3x1024xf32>
    %cst_4 = arith.constant dense<0.000000e+00> : vector<1024xf32>
    %6 = vector.multi_reduction <add>, %1, %cst_4 [0] : vector<16x1024xf32> to vector<1024xf32>
    %7 = vector.shape_cast %6 : vector<1024xf32> to vector<1x1024xf32>
    %cst_5 = arith.constant 1.000000e+00 : f32
    %8 = vector.broadcast %cst_5 : f32 to vector<1x1024xf32>
    %9 = arith.subf %8, %7 : vector<1x1024xf32>
    %10 = tpu.iota {dimensions = array<i32: 0>} : vector<3x1024xi32>
    %c0_i32 = arith.constant 0 : i32
    %11 = vector.broadcast %c0_i32 : i32 to vector<3x1024xi32>
    %12 = arith.cmpi eq, %10, %11 : vector<3x1024xi32>
    %c1_i32 = arith.constant 1 : i32
    %13 = vector.broadcast %c1_i32 : i32 to vector<3x1024xi32>
    %14 = arith.cmpi eq, %10, %13 : vector<3x1024xi32>
    %cst_6 = arith.constant 2.000000e-01 : f32
    %cst_7 = arith.constant 3.000000e-01 : f32
    %15 = vector.broadcast %cst_6 : f32 to vector<3x1024xf32>
    %16 = vector.broadcast %cst_7 : f32 to vector<3x1024xf32>
    %17 = arith.select %14, %15, %16 : vector<3x1024xi1>, vector<3x1024xf32>
    %cst_8 = arith.constant 1.000000e-01 : f32
    %18 = vector.broadcast %cst_8 : f32 to vector<3x1024xf32>
    %19 = arith.select %12, %18, %17 : vector<3x1024xi1>, vector<3x1024xf32>
    %20 = vector.broadcast %9 : vector<1x1024xf32> to vector<3x1024xf32>
    %21 = arith.mulf %19, %20 : vector<3x1024xf32>
    %22 = arith.addf %5, %21 : vector<3x1024xf32>
    %c0_9 = arith.constant 0 : index
    %c0_10 = arith.constant 0 : index
    %23 = vector.load %arg3[%c0_9, %c0_10] : memref<3x1024xf32, #tpu.memory_space<vmem>>, vector<3x1024xf32>
    tpu.vector_store %arg3[%c0_9, %c0_10], %22 {strides = array<i32>} : memref<3x1024xf32, #tpu.memory_space<vmem>>, vector<3x1024xf32>,
    return
  }
  func.func @transform_0(%arg0: i32) -> (i32, i32, i32) {
    %c0_i32 = arith.constant 0 : i32
    %c0_i32_0 = arith.constant 0 : i32
    %c0_i32_1 = arith.constant 0 : i32
    return %c0_i32, %c0_i32_0, %arg0 : i32, i32, i32
  }
  func.func @transform_1(%arg0: i32) -> (i32, i32) {
    %c0_i32 = arith.constant 0 : i32
    %c0_i32_0 = arith.constant 0 : i32
    return %c0_i32, %arg0 : i32, i32
  }
  func.func @transform_2(%arg0: i32) -> (i32, i32) {
    %c0_i32 = arith.constant 0 : i32
    %c0_i32_0 = arith.constant 0 : i32
    return %c0_i32, %arg0 : i32, i32
  }
}

</mosaic_0001>

<llo_original>
// kernel: tpu_custom_call.1
$region0: #{tpu_custom_call.1}
  #allocation0 [shape = 'u32[]', space=smem, size = 0x4, offset = 0x4, fixed_abs, tag = 'smem constant byte address 0x4 - core index']
  #allocation1 [shape = 'u32[144,128]{1,0:T(1,128)}', space=vmem, size = 0x12000, scoped, tag = 'internal scratch']
  %s0 = inlined_call_operand.hbm [shape: f32[3,16,1024], index: 0, kind: input, shape index: {}]
  %s1 = inlined_call_operand.hbm [shape: f32[16,1024], index: 1, kind: input, shape index: {}]
  %s2 = inlined_call_operand.hbm [shape: f32[3,1024], index: 2, kind: output, shape index: {}]
  %s3 = sld [smem:[#allocation0]]
  $region26: #{tpu_custom_call.1} parent=0
    _
  %s5 = ssub.s32 1, %s3
  %s6 = scalar_select 0, %s5, %s3
  $region1: #{tpu_custom_call.1} parent=0
    #allocation2 [shape = 'u8[196608]{0}', space=vmem, size = 0x30000, scoped, tag = 'input window, operand 0, single buffered']
    #allocation3 [shape = 's32[1]{0}', space=sflag, size = 0x4, scoped, tag = 'scoped memory for tpu_custom_call.1']
    #allocation4 [shape = 's32[1]{0}', space=sflag, size = 0x4, scoped, tag = 'scoped memory for tpu_custom_call.1']
    #allocation5 [shape = 'u8[65536]{0}', space=vmem, size = 0x10000, scoped, tag = 'input window, operand 1, single buffered']
    #allocation6 [shape = 's32[1]{0}', space=sflag, size = 0x4, scoped, tag = 'scoped memory for tpu_custom_call.1']
    #allocation7 [shape = 'u8[16384]{0}', space=vmem, size = 0x4000, scoped, tag = 'output window, operand 0, single buffered']
    %7 = vsyncpa [#allocation3], 0
    %8 = vsyncpa [#allocation6], 0
    %9 = vsyncpa [#allocation4], 0
    // Predicated region
    $region2: #{tpu_custom_call.1} parent=1 // pred_check
      _
    $region3: #{tpu_custom_call.1} parent=1 // pred_check_branch
      %11 = sbr.rel (0) target = $region5
    $region4: #{tpu_custom_call.1} parent=1 // pred_region
      %s13 = ssub.s32 6144, 6144
      %14 = vsyncadd [#allocation3], %s13
      %s15 = sshll.u32 [#allocation2], 4
      %s16 = int_to_ptr.vmem [resolvable:$true] %s15
      %21 = dma.hbm_to_vmem [thread:$0]  %s0, 6144, %s16, [#allocation3], 1024, 1024, 64
    $region5: #{tpu_custom_call.1} parent=1 // pred_fallthru
      _
    // Predicated region
    $region6: #{tpu_custom_call.1} parent=1 // pred_check
      _
    $region7: #{tpu_custom_call.1} parent=1 // pred_check_branch
      %23 = sbr.rel (0) target = $region9
    $region8: #{tpu_custom_call.1} parent=1 // pred_region
      %s25 = ssub.s32 2048, 2048
      %26 = vsyncadd [#allocation6], %s25
      %s27 = sshll.u32 [#allocation5], 4
      %s28 = int_to_ptr.vmem [resolvable:$true] %s27
      %33 = dma.hbm_to_vmem [thread:$0]  %s1, 2048, %s28, [#allocation6], 1024, 1024, 64
    $region9: #{tpu_custom_call.1} parent=1 // pred_fallthru
      _
    // Predicated region
    $region10: #{tpu_custom_call.1} parent=1 // pred_check
      _
    $region11: #{tpu_custom_call.1} parent=1 // pred_check_branch
      %35 = sbr.rel (0) target = $region13
    $region12: #{tpu_custom_call.1} parent=1 // pred_region
      %36 = dma.done [#allocation3], 6144
    $region13: #{tpu_custom_call.1} parent=1 // pred_fallthru
      _
    // Predicated region
    $region14: #{tpu_custom_call.1} parent=1 // pred_check
      _
    $region15: #{tpu_custom_call.1} parent=1 // pred_check_branch
      %38 = sbr.rel (0) target = $region17
    $region16: #{tpu_custom_call.1} parent=1 // pred_region
      %39 = dma.done [#allocation6], 2048
    $region17: #{tpu_custom_call.1} parent=1 // pred_fallthru
      _
    %v40 = vld [vmem:[#allocation2] sm:$0xff]
    %v41 = vld [vmem:[#allocation2 + $0x8] sm:$0xff]
    %v42 = vld [vmem:[#allocation2 + $0x10] sm:$0xff]
    %v43 = vld [vmem:[#allocation2 + $0x18] sm:$0xff]
    %v44 = vld [vmem:[#allocation2 + $0x20] sm:$0xff]
    %v45 = vld [vmem:[#allocation2 + $0x28] sm:$0xff]
    %v46 = vld [vmem:[#allocation2 + $0x30] sm:$0xff]
    %v47 = vld [vmem:[#allocation2 + $0x38] sm:$0xff]
    %v48 = vld [vmem:[#allocation2 + $0x40] sm:$0xff]
    %v49 = vld [vmem:[#allocation2 + $0x48] sm:$0xff]
    %v50 = vld [vmem:[#allocation2 + $0x50] sm:$0xff]
    %v51 = vld [vmem:[#allocation2 + $0x58] sm:$0xff]
    %v52 = vld [vmem:[#allocation2 + $0x60] sm:$0xff]
    %v53 = vld [vmem:[#allocation2 + $0x68] sm:$0xff]
    %v54 = vld [vmem:[#allocation2 + $0x70] sm:$0xff]
    %v55 = vld [vmem:[#allocation2 + $0x78] sm:$0xff]
    %v56 = vld [vmem:[#allocation2 + $0x80] sm:$0xff]
    %v57 = vld [vmem:[#allocation2 + $0x88] sm:$0xff]
    %v58 = vld [vmem:[#allocation2 + $0x90] sm:$0xff]
    %v59 = vld [vmem:[#allocation2 + $0x98] sm:$0xff]
    %v60 = vld [vmem:[#allocation2 + $0xa0] sm:$0xff]
    %v61 = vld [vmem:[#allocation2 + $0xa8] sm:$0xff]
    %v62 = vld [vmem:[#allocation2 + $0xb0] sm:$0xff]
    %v63 = vld [vmem:[#allocation2 + $0xb8] sm:$0xff]
    %v64 = vld [vmem:[#allocation2 + $0xc0] sm:$0xff]
    %v65 = vld [vmem:[#allocation2 + $0xc8] sm:$0xff]
    %v66 = vld [vmem:[#allocation2 + $0xd0] sm:$0xff]
    %v67 = vld [vmem:[#allocation2 + $0xd8] sm:$0xff]
    %v68 = vld [vmem:[#allocation2 + $0xe0] sm:$0xff]
    %v69 = vld [vmem:[#allocation2 + $0xe8] sm:$0xff]
    %v70 = vld [vmem:[#allocation2 + $0xf0] sm:$0xff]
    %v71 = vld [vmem:[#allocation2 + $0xf8] sm:$0xff]
    %v72 = vld [vmem:[#allocation2 + $0x100] sm:$0xff]
    %v73 = vld [vmem:[#allocation2 + $0x108] sm:$0xff]
    %v74 = vld [vmem:[#allocation2 + $0x110] sm:$0xff]
    %v75 = vld [vmem:[#allocation2 + $0x118] sm:$0xff]
    %v76 = vld [vmem:[#allocation2 + $0x120] sm:$0xff]
    %v77 = vld [vmem:[#allocation2 + $0x128] sm:$0xff]
    %v78 = vld [vmem:[#allocation2 + $0x130] sm:$0xff]
    %v79 = vld [vmem:[#allocation2 + $0x138] sm:$0xff]
    %v80 = vld [vmem:[#allocation2 + $0x140] sm:$0xff]
    %v81 = vld [vmem:[#allocation2 + $0x148] sm:$0xff]
    %v82 = vld [vmem:[#allocation2 + $0x150] sm:$0xff]
    %v83 = vld [vmem:[#allocation2 + $0x158] sm:$0xff]
    %v84 = vld [vmem:[#allocation2 + $0x160] sm:$0xff]
    %v85 = vld [vmem:[#allocation2 + $0x168] sm:$0xff]
    %v86 = vld [vmem:[#allocation2 + $0x170] sm:$0xff]
    %v87 = vld [vmem:[#allocation2 + $0x178] sm:$0xff]
    %v88 = vld [vmem:[#allocation5] sm:$0xff]
    %v89 = vld [vmem:[#allocation5 + $0x8] sm:$0xff]
    %v90 = vld [vmem:[#allocation5 + $0x10] sm:$0xff]
    %v91 = vld [vmem:[#allocation5 + $0x18] sm:$0xff]
    %v92 = vld [vmem:[#allocation5 + $0x20] sm:$0xff]
    %v93 = vld [vmem:[#allocation5 + $0x28] sm:$0xff]
    %v94 = vld [vmem:[#allocation5 + $0x30] sm:$0xff]
    %v95 = vld [vmem:[#allocation5 + $0x38] sm:$0xff]
    %v96 = vld [vmem:[#allocation5 + $0x40] sm:$0xff]
    %v97 = vld [vmem:[#allocation5 + $0x48] sm:$0xff]
    %v98 = vld [vmem:[#allocation5 + $0x50] sm:$0xff]
    %v99 = vld [vmem:[#allocation5 + $0x58] sm:$0xff]
    %v100 = vld [vmem:[#allocation5 + $0x60] sm:$0xff]
    %v101 = vld [vmem:[#allocation5 + $0x68] sm:$0xff]
    %v102 = vld [vmem:[#allocation5 + $0x70] sm:$0xff]
    %v103 = vld [vmem:[#allocation5 + $0x78] sm:$0xff]
    %v104 = vmul.f32 %v40, %v88
    %v105 = vmul.f32 %v41, %v89
    %v106 = vmul.f32 %v42, %v90
    %v107 = vmul.f32 %v43, %v91
    %v108 = vmul.f32 %v44, %v92
    %v109 = vmul.f32 %v45, %v93
    %v110 = vmul.f32 %v46, %v94
    %v111 = vmul.f32 %v47, %v95
    %v112 = vmul.f32 %v48, %v96
    %v113 = vmul.f32 %v49, %v97
    %v114 = vmul.f32 %v50, %v98
    %v115 = vmul.f32 %v51, %v99
    %v116 = vmul.f32 %v52, %v100
    %v117 = vmul.f32 %v53, %v101
    %v118 = vmul.f32 %v54, %v102
    %v119 = vmul.f32 %v55, %v103
    %v120 = vmul.f32 %v56, %v88
    %v121 = vmul.f32 %v57, %v89
    %v122 = vmul.f32 %v58, %v90
    %v123 = vmul.f32 %v59, %v91
    %v124 = vmul.f32 %v60, %v92
    %v125 = vmul.f32 %v61, %v93
    %v126 = vmul.f32 %v62, %v94
    %v127 = vmul.f32 %v63, %v95
    %v128 = vmul.f32 %v64, %v96
    %v129 = vmul.f32 %v65, %v97
    %v130 = vmul.f32 %v66, %v98
    %v131 = vmul.f32 %v67, %v99
    %v132 = vmul.f32 %v68, %v100
    %v133 = vmul.f32 %v69, %v101
    %v134 = vmul.f32 %v70, %v102
    %v135 = vmul.f32 %v71, %v103
    %v136 = vmul.f32 %v72, %v88
    %v137 = vmul.f32 %v73, %v89
    %v138 = vmul.f32 %v74, %v90
    %v139 = vmul.f32 %v75, %v91
    %v140 = vmul.f32 %v76, %v92
    %v141 = vmul.f32 %v77, %v93
    %v142 = vmul.f32 %v78, %v94
    %v143 = vmul.f32 %v79, %v95
    %v144 = vmul.f32 %v80, %v96
    %v145 = vmul.f32 %v81, %v97
    %v146 = vmul.f32 %v82, %v98
    %v147 = vmul.f32 %v83, %v99
    %v148 = vmul.f32 %v84, %v100
    %v149 = vmul.f32 %v85, %v101
    %v150 = vmul.f32 %v86, %v102
    %v151 = vmul.f32 %v87, %v103
    %v152 = vadd.f32 %v104, %v112
    %v153 = vrot.slane %v152, 4
    %v154 = vadd.f32 %v152, %v153
    %v155 = vrot.slane %v154, 2
    %v156 = vadd.f32 %v154, %v155
    %v157 = vrot.slane %v156, 1
    %v158 = vadd.f32 %v156, %v157
    %v159 = vadd.f32 %v105, %v113
    %v160 = vrot.slane %v159, 4
    %v161 = vadd.f32 %v159, %v160
    %v162 = vrot.slane %v161, 2
    %v163 = vadd.f32 %v161, %v162
    %v164 = vrot.slane %v163, 1
    %v165 = vadd.f32 %v163, %v164
    %v166 = vadd.f32 %v106, %v114
    %v167 = vrot.slane %v166, 4
    %v168 = vadd.f32 %v166, %v167
    %v169 = vrot.slane %v168, 2
    %v170 = vadd.f32 %v168, %v169
    %v171 = vrot.slane %v170, 1
    %v172 = vadd.f32 %v170, %v171
    %v173 = vadd.f32 %v107, %v115
    %v174 = vrot.slane %v173, 4
    %v175 = vadd.f32 %v173, %v174
    %v176 = vrot.slane %v175, 2
    %v177 = vadd.f32 %v175, %v176
    %v178 = vrot.slane %v177, 1
    %v179 = vadd.f32 %v177, %v178
    %v180 = vadd.f32 %v108, %v116
    %v181 = vrot.slane %v180, 4
    %v182 = vadd.f32 %v180, %v181
    %v183 = vrot.slane %v182, 2
    %v184 = vadd.f32 %v182, %v183
    %v185 = vrot.slane %v184, 1
    %v186 = vadd.f32 %v184, %v185
    %v187 = vadd.f32 %v109, %v117
    %v188 = vrot.slane %v187, 4
    %v189 = vadd.f32 %v187, %v188
    %v190 = vrot.slane %v189, 2
    %v191 = vadd.f32 %v189, %v190
    %v192 = vrot.slane %v191, 1
    %v193 = vadd.f32 %v191, %v192
    %v194 = vadd.f32 %v110, %v118
    %v195 = vrot.slane %v194, 4
    %v196 = vadd.f32 %v194, %v195
    %v197 = vrot.slane %v196, 2
    %v198 = vadd.f32 %v196, %v197
    %v199 = vrot.slane %v198, 1
    %v200 = vadd.f32 %v198, %v199
    %v201 = vadd.f32 %v111, %v119
    %v202 = vrot.slane %v201, 4
    %v203 = vadd.f32 %v201, %v202
    %v204 = vrot.slane %v203, 2
    %v205 = vadd.f32 %v203, %v204
    %v206 = vrot.slane %v205, 1
    %v207 = vadd.f32 %v205, %v206
    %v208 = vadd.f32 %v120, %v128
    %v209 = vrot.slane %v208, 4
    %v210 = vadd.f32 %v208, %v209
    %v211 = vrot.slane %v210, 2
    %v212 = vadd.f32 %v210, %v211
    %v213 = vrot.slane %v212, 1
    %v214 = vadd.f32 %v212, %v213
    %v215 = vadd.f32 %v121, %v129
    %v216 = vrot.slane %v215, 4
    %v217 = vadd.f32 %v215, %v216
    %v218 = vrot.slane %v217, 2
    %v219 = vadd.f32 %v217, %v218
    %v220 = vrot.slane %v219, 1
    %v221 = vadd.f32 %v219, %v220
    %v222 = vadd.f32 %v122, %v130
    %v223 = vrot.slane %v222, 4
    %v224 = vadd.f32 %v222, %v223
    %v225 = vrot.slane %v224, 2
    %v226 = vadd.f32 %v224, %v225
    %v227 = vrot.slane %v226, 1
    %v228 = vadd.f32 %v226, %v227
    %v229 = vadd.f32 %v123, %v131
    %v230 = vrot.slane %v229, 4
    %v231 = vadd.f32 %v229, %v230
    %v232 = vrot.slane %v231, 2
    %v233 = vadd.f32 %v231, %v232
    %v234 = vrot.slane %v233, 1
    %v235 = vadd.f32 %v233, %v234
    %v236 = vadd.f32 %v124, %v132
    %v237 = vrot.slane %v236, 4
    %v238 = vadd.f32 %v236, %v237
    %v239 = vrot.slane %v238, 2
    %v240 = vadd.f32 %v238, %v239
    %v241 = vrot.slane %v240, 1
    %v242 = vadd.f32 %v240, %v241
    %v243 = vadd.f32 %v125, %v133
    %v244 = vrot.slane %v243, 4
    %v245 = vadd.f32 %v243, %v244
    %v246 = vrot.slane %v245, 2
    %v247 = vadd.f32 %v245, %v246
    %v248 = vrot.slane %v247, 1
    %v249 = vadd.f32 %v247, %v248
    %v250 = vadd.f32 %v126, %v134
    %v251 = vrot.slane %v250, 4
    %v252 = vadd.f32 %v250, %v251
    %v253 = vrot.slane %v252, 2
    %v254 = vadd.f32 %v252, %v253
    %v255 = vrot.slane %v254, 1
    %v256 = vadd.f32 %v254, %v255
    %v257 = vadd.f32 %v127, %v135
    %v258 = vrot.slane %v257, 4
    %v259 = vadd.f32 %v257, %v258
    %v260 = vrot.slane %v259, 2
    %v261 = vadd.f32 %v259, %v260
    %v262 = vrot.slane %v261, 1
    %v263 = vadd.f32 %v261, %v262
    %v264 = vadd.f32 %v136, %v144
    %v265 = vrot.slane %v264, 4
    %v266 = vadd.f32 %v264, %v265
    %v267 = vrot.slane %v266, 2
    %v268 = vadd.f32 %v266, %v267
    %v269 = vrot.slane %v268, 1
    %v270 = vadd.f32 %v268, %v269
    %v271 = vadd.f32 %v137, %v145
    %v272 = vrot.slane %v271, 4
    %v273 = vadd.f32 %v271, %v272
    %v274 = vrot.slane %v273, 2
    %v275 = vadd.f32 %v273, %v274
    %v276 = vrot.slane %v275, 1
    %v277 = vadd.f32 %v275, %v276
    %v278 = vadd.f32 %v138, %v146
    %v279 = vrot.slane %v278, 4
    %v280 = vadd.f32 %v278, %v279
    %v281 = vrot.slane %v280, 2
    %v282 = vadd.f32 %v280, %v281
    %v283 = vrot.slane %v282, 1
    %v284 = vadd.f32 %v282, %v283
    %v285 = vadd.f32 %v139, %v147
    %v286 = vrot.slane %v285, 4
    %v287 = vadd.f32 %v285, %v286
    %v288 = vrot.slane %v287, 2
    %v289 = vadd.f32 %v287, %v288
    %v290 = vrot.slane %v289, 1
    %v291 = vadd.f32 %v289, %v290
    %v292 = vadd.f32 %v140, %v148
    %v293 = vrot.slane %v292, 4
    %v294 = vadd.f32 %v292, %v293
    %v295 = vrot.slane %v294, 2
    %v296 = vadd.f32 %v294, %v295
    %v297 = vrot.slane %v296, 1
    %v298 = vadd.f32 %v296, %v297
    %v299 = vadd.f32 %v141, %v149
    %v300 = vrot.slane %v299, 4
    %v301 = vadd.f32 %v299, %v300
    %v302 = vrot.slane %v301, 2
    %v303 = vadd.f32 %v301, %v302
    %v304 = vrot.slane %v303, 1
    %v305 = vadd.f32 %v303, %v304
    %v306 = vadd.f32 %v142, %v150
    %v307 = vrot.slane %v306, 4
    %v308 = vadd.f32 %v306, %v307
    %v309 = vrot.slane %v308, 2
    %v310 = vadd.f32 %v308, %v309
    %v311 = vrot.slane %v310, 1
    %v312 = vadd.f32 %v310, %v311
    %v313 = vadd.f32 %v143, %v151
    %v314 = vrot.slane %v313, 4
    %v315 = vadd.f32 %v313, %v314
    %v316 = vrot.slane %v315, 2
    %v317 = vadd.f32 %v315, %v316
    %v318 = vrot.slane %v317, 1
    %v319 = vadd.f32 %v317, %v318
    %v320 = vadd.f32 %v88, %v96
    %v321 = vrot.slane %v320, 4
    %v322 = vadd.f32 %v320, %v321
    %v323 = vrot.slane %v322, 2
    %v324 = vadd.f32 %v322, %v323
    %v325 = vrot.slane %v324, 1
    %v326 = vadd.f32 %v324, %v325
    %v327 = vadd.f32 %v89, %v97
    %v328 = vrot.slane %v327, 4
    %v329 = vadd.f32 %v327, %v328
    %v330 = vrot.slane %v329, 2
    %v331 = vadd.f32 %v329, %v330
    %v332 = vrot.slane %v331, 1
    %v333 = vadd.f32 %v331, %v332
    %v334 = vadd.f32 %v90, %v98
    %v335 = vrot.slane %v334, 4
    %v336 = vadd.f32 %v334, %v335
    %v337 = vrot.slane %v336, 2
    %v338 = vadd.f32 %v336, %v337
    %v339 = vrot.slane %v338, 1
    %v340 = vadd.f32 %v338, %v339
    %v341 = vadd.f32 %v91, %v99
    %v342 = vrot.slane %v341, 4
    %v343 = vadd.f32 %v341, %v342
    %v344 = vrot.slane %v343, 2
    %v345 = vadd.f32 %v343, %v344
    %v346 = vrot.slane %v345, 1
    %v347 = vadd.f32 %v345, %v346
    %v348 = vadd.f32 %v92, %v100
    %v349 = vrot.slane %v348, 4
    %v350 = vadd.f32 %v348, %v349
    %v351 = vrot.slane %v350, 2
    %v352 = vadd.f32 %v350, %v351
    %v353 = vrot.slane %v352, 1
    %v354 = vadd.f32 %v352, %v353
    %v355 = vadd.f32 %v93, %v101
    %v356 = vrot.slane %v355, 4
    %v357 = vadd.f32 %v355, %v356
    %v358 = vrot.slane %v357, 2
    %v359 = vadd.f32 %v357, %v358
    %v360 = vrot.slane %v359, 1
    %v361 = vadd.f32 %v359, %v360
    %v362 = vadd.f32 %v94, %v102
    %v363 = vrot.slane %v362, 4
    %v364 = vadd.f32 %v362, %v363
    %v365 = vrot.slane %v364, 2
    %v366 = vadd.f32 %v364, %v365
    %v367 = vrot.slane %v366, 1
    %v368 = vadd.f32 %v366, %v367
    %v369 = vadd.f32 %v95, %v103
    %v370 = vrot.slane %v369, 4
    %v371 = vadd.f32 %v369, %v370
    %v372 = vrot.slane %v371, 2
    %v373 = vadd.f32 %v371, %v372
    %v374 = vrot.slane %v373, 1
    %v375 = vadd.f32 %v373, %v374
    %v376 = vsub.f32 1.0, %v326
    %v377 = vsub.f32 1.0, %v333
    %v378 = vsub.f32 1.0, %v340
    %v379 = vsub.f32 1.0, %v347
    %v380 = vsub.f32 1.0, %v354
    %v381 = vsub.f32 1.0, %v361
    %v382 = vsub.f32 1.0, %v368
    %v383 = vsub.f32 1.0, %v375
    %v384 = vlaneseq
    %v385 = vshrl.u32 %v384, 7
    %vm386 = vcmp.eq.s32.totalorder %v385, 0
    %vm387 = vcmp.eq.s32.totalorder %v385, 1
    %v388 = vsel %vm387, 0.2, 0.3
    %v389 = vsel %vm386, 0.1, %v388
    %v390 = vmul.f32 %v389, %v376
    %v391 = vmul.f32 %v389, %v377
    %v392 = vmul.f32 %v389, %v378
    %v393 = vmul.f32 %v389, %v379
    %v394 = vmul.f32 %v389, %v380
    %v395 = vmul.f32 %v389, %v381
    %v396 = vmul.f32 %v389, %v382
    %v397 = vmul.f32 %v389, %v383
    %v406 = vrot.slane %v390, 1
    %v407 = vrot.slane %v391, 1
    %v408 = vrot.slane %v392, 1
    %v409 = vrot.slane %v393, 1
    %v410 = vrot.slane %v394, 1
    %v411 = vrot.slane %v395, 1
    %v412 = vrot.slane %v396, 1
    %v413 = vrot.slane %v397, 1
    %v414 = vrot.slane %v390, 2
    %v415 = vrot.slane %v391, 2
    %v416 = vrot.slane %v392, 2
    %v417 = vrot.slane %v393, 2
    %v418 = vrot.slane %v394, 2
    %v419 = vrot.slane %v395, 2
    %v420 = vrot.slane %v396, 2
    %v421 = vrot.slane %v397, 2
    %v446 = vadd.f32 %v158, %v390
    %v447 = vadd.f32 %v165, %v391
    %v448 = vadd.f32 %v172, %v392
    %v449 = vadd.f32 %v179, %v393
    %v450 = vadd.f32 %v186, %v394
    %v451 = vadd.f32 %v193, %v395
    %v452 = vadd.f32 %v200, %v396
    %v453 = vadd.f32 %v207, %v397
    %v454 = vadd.f32 %v214, %v406
    %v455 = vadd.f32 %v221, %v407
    %v456 = vadd.f32 %v228, %v408
    %v457 = vadd.f32 %v235, %v409
    %v458 = vadd.f32 %v242, %v410
    %v459 = vadd.f32 %v249, %v411
    %v460 = vadd.f32 %v256, %v412
    %v461 = vadd.f32 %v263, %v413
    %v462 = vadd.f32 %v270, %v414
    %v463 = vadd.f32 %v277, %v415
    %v464 = vadd.f32 %v284, %v416
    %v465 = vadd.f32 %v291, %v417
    %v466 = vadd.f32 %v298, %v418
    %v467 = vadd.f32 %v305, %v419
    %v468 = vadd.f32 %v312, %v420
    %v469 = vadd.f32 %v319, %v421
    %v494 = vcombine.low %v446, %v447
    %v495 = vcombine.low %v448, %v449
    %v496 = vcombine.low %v450, %v451
    %v497 = vcombine.low %v452, %v453
    %v498 = vcombine.low %v454, %v455
    %v499 = vcombine.low %v456, %v457
    %v500 = vcombine.low %v458, %v459
    %v501 = vcombine.low %v460, %v461
    %v502 = vcombine.low %v462, %v463
    %v503 = vcombine.low %v464, %v465
    %v504 = vcombine.low %v466, %v467
    %v505 = vcombine.low %v468, %v469
    %v506 = vrot.slane %v498, 7
    %vm507 = vcmask 1041409
    %v508 = vsel %vm507, %v506, %v494
    %vm509 = vcmask 1045509
    %v510 = vsel %vm509, %v506, %v508
    %v511 = vrot.slane %v502, 6
    %vm512 = vcmask 1042434
    %v513 = vsel %vm512, %v511, %v510
    %vm514 = vcmask 1046534
    %v515 = vsel %vm514, %v511, %v513
    %v516 = vrot.slane %v499, 7
    %v517 = vsel %vm507, %v516, %v495
    %v518 = vsel %vm509, %v516, %v517
    %v519 = vrot.slane %v503, 6
    %v520 = vsel %vm512, %v519, %v518
    %v521 = vsel %vm514, %v519, %v520
    %v522 = vrot.slane %v500, 7
    %v523 = vsel %vm507, %v522, %v496
    %v524 = vsel %vm509, %v522, %v523
    %v525 = vrot.slane %v504, 6
    %v526 = vsel %vm512, %v525, %v524
    %v527 = vsel %vm514, %v525, %v526
    %v528 = vrot.slane %v501, 7
    %v529 = vsel %vm507, %v528, %v497
    %v530 = vsel %vm509, %v528, %v529
    %v531 = vrot.slane %v505, 6
    %v532 = vsel %vm512, %v531, %v530
    %v533 = vsel %vm514, %v531, %v532
    %538 = vst [vmem:[#allocation7] sm:$0x77] %v515
    %539 = vst [vmem:[#allocation7 + $0x8] sm:$0x77] %v521
    %540 = vst [vmem:[#allocation7 + $0x10] sm:$0x77] %v527
    %541 = vst [vmem:[#allocation7 + $0x18] sm:$0x77] %v533
    // Predicated region
    $region18: #{tpu_custom_call.1} parent=1 // pred_check
      _
    $region19: #{tpu_custom_call.1} parent=1 // pred_check_branch
      %543 = sbr.rel (0) target = $region21
    $region20: #{tpu_custom_call.1} parent=1 // pred_region
      %s545 = ssub.s32 512, 512
      %546 = vsyncadd [#allocation4], %s545
      %s548 = sshll.u32 [#allocation7], 4
      %s549 = int_to_ptr.vmem [resolvable:$true] %s548
      %551 = dma.vmem_to_hbm [thread:$0]  %s549, 512, %s2, [#allocation4]
    $region21: #{tpu_custom_call.1} parent=1 // pred_fallthru
      _
    // Predicated region
    $region22: #{tpu_custom_call.1} parent=1 // pred_check
      _
    $region23: #{tpu_custom_call.1} parent=1 // pred_check_branch
      %553 = sbr.rel (0) target = $region25
    $region24: #{tpu_custom_call.1} parent=1 // pred_region
      %554 = dma.done [#allocation4], 512
    $region25: #{tpu_custom_call.1} parent=1 // pred_fallthru
      _
    %555 = vsyncpa [#allocation3], 1
    %556 = vsyncpa [#allocation6], 1
    %557 = vsyncpa [#allocation4], 1

</llo_original>
